<compile_context>
chip_gen: v7x
topology: tpu7x:2x2x1
jax: 0.10.0
libtpu: 0.0.40
codegen_flags: <defaults>
</compile_context>

<pallas_src>
import functools
import math

import jax
import jax.numpy as jnp
import numpy as np
from jax.experimental import pallas as pl
from jax.experimental.pallas import tpu as pltpu

FREQ_EMB_SIZE = 256   # TimeEmbedding.frequency_embedding_size
PAD = 128             # lane-dense padded feature width for every layer
MAX_TILE_N = 512      # rows per grid step (512 ≈ 85% of HBM roofline; fits
                      # comfortably in every generation's default VMEM limit)


def _round_up(x, m):
    return (x + m - 1) // m * m


def _choose_tile(n):
    """Row-tile size: multiple of 8, <= MAX_TILE_N, and when the batch allows
    it the grid gets >= 2 steps so v7x's two TensorCores both do work."""
    n8 = _round_up(max(n, 1), 8)
    if n8 <= 8:
        return n8
    return min(MAX_TILE_N, _round_up((n8 + 1) // 2, 8))


# ----------------------------------------------------------------------------
# Fused SimpleNet kernel: all TimeLinear layers in one kernel body.
#
#   Time branch (independent of h, hoisted off the serial chain):
#     e_all   = silu(t_freq @ W1_all + b1_all)        (one wide MXU op, N=L*128)
#     alpha_i = e_all[:, i] @ W2_i + b2_i             (per layer, off-chain)
#   Serial h chain (one 128x128 matmul + modulate per layer):
#     h = alpha_i * (h @ Wfc_i + bfc_i) ; relu between layers
# ----------------------------------------------------------------------------
def _simple_net_kernel(*refs, num_layers):
    # ref layout:
    #   refs[0]            x_ref      (tile_n, PAD)
    #   refs[1]            tf_ref     (tile_n, FREQ_EMB_SIZE)
    #   refs[2]            w1_all_ref (FREQ_EMB_SIZE, L*PAD)
    #   refs[3]            b1_all_ref (1, L*PAD)
    #   refs[4 : 4+4L]     per layer: w_fc (PAD,PAD), b_fc (1,PAD),
    #                                  w2   (PAD,PAD), b2   (1,PAD)
    #   refs[4+4L]         o_ref      (tile_n, PAD)
    x_ref, tf_ref, w1_all_ref, b1_all_ref = refs[:4]
    layer_refs = refs[4:4 + 4 * num_layers]
    o_ref = refs[4 + 4 * num_layers]

    # ---- time branch: all layers' time-MLPs, batched & hoisted ----
    e_all = jnp.dot(tf_ref[...], w1_all_ref[...],
                    preferred_element_type=jnp.float32) + b1_all_ref[...]
    e_all = e_all * jax.nn.sigmoid(e_all)          # SiLU

    alphas = []
    for i in range(num_layers):
        _, _, w2_ref, b2_ref = layer_refs[4 * i:4 * (i + 1)]
        e_i = e_all[:, i * PAD:(i + 1) * PAD]
        alphas.append(jnp.dot(e_i, w2_ref[...],
                              preferred_element_type=jnp.float32) + b2_ref[...])

    # ---- serial h chain (h kept as an SSA value, never round-tripped) ----
    h = x_ref[...]
    for i in range(num_layers):
        w_fc_ref, b_fc_ref, _, _ = layer_refs[4 * i:4 * (i + 1)]
        fc = jnp.dot(h, w_fc_ref[...],
                     preferred_element_type=jnp.float32) + b_fc_ref[...]
        h = alphas[i] * fc                          # TimeLinear modulation
        if i != num_layers - 1:
            h = jnp.maximum(h, 0.0)                 # inter-layer ReLU
    o_ref[...] = h                                  # lane-dense final store


# ----------------------------------------------------------------------------
# Sinusoidal timestep embedding (matches TimeEmbedding.timestep_embedding).
# TODO(synk): could be folded into the kernel via scalar-prefetched t to save
# the (N, 256) t_freq HBM stream; kept in the jitted wrapper for simplicity.
# ----------------------------------------------------------------------------
def timestep_embedding(t, dim=FREQ_EMB_SIZE, max_period=10000.0):
    if t.ndim == 0:
        t = t[None]
    half = dim // 2
    freqs = jnp.exp(
        -math.log(max_period) * jnp.arange(half, dtype=jnp.float32) / half)
    args = t[:, None].astype(jnp.float32) * freqs[None, :]
    return jnp.concatenate([jnp.cos(args), jnp.sin(args)], axis=-1)  # dim even


# ----------------------------------------------------------------------------
# Parameters: nn.Linear-shaped (stored transposed), deterministic init.
# ----------------------------------------------------------------------------
def init_time_linear(key, dim_in, dim_out):
    ks = jax.random.split(key, 6)

    def linear(kw, kb, fan_in, fan_out):
        bound = 1.0 / math.sqrt(fan_in)
        w = jax.random.uniform(kw, (fan_in, fan_out), jnp.float32, -bound, bound)
        b = jax.random.uniform(kb, (1, fan_out), jnp.float32, -bound, bound)
        return w, b

    w_fc, b_fc = linear(ks[0], ks[1], dim_in, dim_out)          # fc
    w1, b1 = linear(ks[2], ks[3], FREQ_EMB_SIZE, dim_out)       # mlp[0]
    w2, b2 = linear(ks[4], ks[5], dim_out, dim_out)             # mlp[2]
    return {"w_fc": w_fc, "b_fc": b_fc, "w1": w1, "b1": b1,
            "w2": w2, "b2": b2}


def init_simple_net(key, dim_in, dim_out, dim_hids):
    dims = [dim_in] + list(dim_hids) + [dim_out]
    params = []
    for i in range(len(dims) - 1):
        key, sub = jax.random.split(key)
        params.append(init_time_linear(sub, dims[i], dims[i + 1]))
    return params


def pack_params(params):
    """Zero-pad every feature dim to lane-dense 128.  All layers' time-MLP
    first-layer weights are batched into one wide (256, L*128) matrix so the
    kernel can do them in a single MXU op.  Padded entries are exactly zero
    (zero-propagation through padded lanes relies on this)."""
    num_layers = len(params)
    w1_all = jnp.zeros((FREQ_EMB_SIZE, num_layers * PAD), jnp.float32)
    b1_all = jnp.zeros((1, num_layers * PAD), jnp.float32)
    per_layer = []
    for i, p in enumerate(params):
        din, dout = p["w_fc"].shape
        w1_all = w1_all.at[:, i * PAD:i * PAD + dout].set(p["w1"])
        b1_all = b1_all.at[:, i * PAD:i * PAD + dout].set(p["b1"])
        w_fc = jnp.zeros((PAD, PAD), jnp.float32).at[:din, :dout].set(p["w_fc"])
        b_fc = jnp.zeros((1, PAD), jnp.float32).at[:, :dout].set(p["b_fc"])
        w2 = jnp.zeros((PAD, PAD), jnp.float32).at[:dout, :dout].set(p["w2"])
        b2 = jnp.zeros((1, PAD), jnp.float32).at[:, :dout].set(p["b2"])
        per_layer += [w_fc, b_fc, w2, b2]
    return [w1_all, b1_all] + per_layer


# ----------------------------------------------------------------------------
# SimpleNet forward factory: weights packed ONCE, forward is jitted,
# one pallas_call per invocation, row-tiled parallel grid, VMEM-resident
# weights.
# ----------------------------------------------------------------------------
def make_simple_net(params):
    num_layers = len(params)
    dim_out = params[-1]["w_fc"].shape[1]
    assert all(p["w_fc"].shape[1] <= PAD for p in params)
    assert params[0]["w_fc"].shape[0] <= PAD

    flat_params = pack_params(params)                 # done once, not per call
    kernel = functools.partial(_simple_net_kernel, num_layers=num_layers)

    @jax.jit
    def forward_impl(flat, x, t):
        n, dim_in = x.shape
        t = jnp.broadcast_to(jnp.atleast_1d(t).astype(jnp.float32), (n,))
        t_freq = timestep_embedding(t)                          # (n, 256)

        tile_n = _choose_tile(n)
        n_pad = _round_up(n, tile_n)

        x_p = jnp.zeros((n_pad, PAD), jnp.float32).at[:n, :dim_in].set(x)
        tf_p = jnp.zeros((n_pad, FREQ_EMB_SIZE), jnp.float32).at[:n].set(t_freq)

        row_x = pl.BlockSpec((tile_n, PAD), lambda i: (i, 0))
        row_tf = pl.BlockSpec((tile_n, FREQ_EMB_SIZE), lambda i: (i, 0))
        weight_specs = [pl.BlockSpec(p.shape, lambda i: (0, 0)) for p in flat]

        out_p = pl.pallas_call(
            kernel,
            out_shape=jax.ShapeDtypeStruct((n_pad, PAD), jnp.float32),
            grid=(n_pad // tile_n,),
            in_specs=[row_x, row_tf] + weight_specs,
            out_specs=pl.BlockSpec((tile_n, PAD), lambda i: (i, 0)),
            compiler_params=pltpu.CompilerParams(
                dimension_semantics=("parallel",)),
        )(x_p, tf_p, *flat)

        return out_p[:n, :dim_out]

    def forward(x, t):
        return forward_impl(flat_params, x, t)

    return forward


# Pure-JAX reference (mirrors the PyTorch math exactly) for validation.
def simple_net_reference(params, x, t):
    t_freq = timestep_embedding(t)
    h = x
    for i, p in enumerate(params):
        fc = h @ p["w_fc"] + p["b_fc"]
        e = t_freq @ p["w1"] + p["b1"]
        e = e * jax.nn.sigmoid(e)
        alpha = e @ p["w2"] + p["b2"]
        h = alpha * fc
        if i != len(params) - 1:
            h = jnp.maximum(h, 0.0)
    return h


if __name__ == "__main__":
    # 2D-plot diffusion: dim_in = dim_out = 2, two hidden layers.
    dim_in, dim_out = 2, 2
    dim_hids = [32, 64]
    num_timesteps = 1000
    batch = 8

    key = jax.random.PRNGKey(0)
    k_params, k_x, k_t = jax.random.split(key, 3)

    params = init_simple_net(k_params, dim_in, dim_out, dim_hids)
    forward = make_simple_net(params)

    x = jax.random.normal(k_x, (batch, dim_in), dtype=jnp.float32)
    t = jax.random.randint(k_t, (batch,), 0, num_timesteps).astype(jnp.float32)

    out = jax.block_until_ready(forward(x, t))
    ref = jax.block_until_ready(simple_net_reference(params, x, t))
    assert out.shape == (batch, dim_out)
    np.testing.assert_allclose(np.asarray(out), np.asarray(ref),
                               rtol=1e-4, atol=1e-4)

    # Second check: a batch that exercises the multi-tile (grid >= 2) path
    # and the row-padding logic.
    batch2 = 40
    k_x2, k_t2 = jax.random.split(jax.random.PRNGKey(1))
    x2 = jax.random.normal(k_x2, (batch2, dim_in), dtype=jnp.float32)
    t2 = jax.random.randint(k_t2, (batch2,), 0, num_timesteps).astype(jnp.float32)
    out2 = jax.block_until_ready(forward(x2, t2))
    ref2 = jax.block_until_ready(simple_net_reference(params, x2, t2))
    assert out2.shape == (batch2, dim_out)
    np.testing.assert_allclose(np.asarray(out2), np.asarray(ref2),
                               rtol=1e-4, atol=1e-4)

    print("KERNEL_OK")
</pallas_src>

<mosaic_0001>
module attributes {stable_mosaic.version = 11 : i64} {
  func.func @_simple_net_kernel(%arg0: i32, %arg1: memref<8x128xf32, #tpu.memory_space<vmem>>, %arg2: memref<8x256xf32, #tpu.memory_space<vmem>>, %arg3: memref<256x384xf32, #tpu.memory_space<vmem>>, %arg4: memref<1x384xf32, #tpu.memory_space<vmem>>, %arg5: memref<128x128xf32, #tpu.memory_space<vmem>>, %arg6: memref<1x128xf32, #tpu.memory_space<vmem>>, %arg7: memref<128x128xf32, #tpu.memory_space<vmem>>, %arg8: memref<1x128xf32, #tpu.memory_space<vmem>>, %arg9: memref<128x128xf32, #tpu.memory_space<vmem>>, %arg10: memref<1x128xf32, #tpu.memory_space<vmem>>, %arg11: memref<128x128xf32, #tpu.memory_space<vmem>>, %arg12: memref<1x128xf32, #tpu.memory_space<vmem>>, %arg13: memref<128x128xf32, #tpu.memory_space<vmem>>, %arg14: memref<1x128xf32, #tpu.memory_space<vmem>>, %arg15: memref<128x128xf32, #tpu.memory_space<vmem>>, %arg16: memref<1x128xf32, #tpu.memory_space<vmem>>, %arg17: memref<8x128xf32, #tpu.memory_space<vmem>>) attributes {dimension_semantics = [#tpu.dimension_semantics<parallel>], iteration_bounds = array<i64: 1>, scalar_prefetch = 0 : i64, scratch_operands = 0 : i64, tpu.core_type = #tpu.core_type<tc>, window_params = [{transform_indices = @transform_0, window_bounds = array<i64: 8, 128>}, {transform_indices = @transform_1, window_bounds = array<i64: 8, 256>}, {pipeline_mode = #tpu.pipeline_mode<synchronous>, transform_indices = @transform_2, window_bounds = array<i64: 256, 384>}, {pipeline_mode = #tpu.pipeline_mode<synchronous>, transform_indices = @transform_3, window_bounds = array<i64: 1, 384>}, {pipeline_mode = #tpu.pipeline_mode<synchronous>, transform_indices = @transform_4, window_bounds = array<i64: 128, 128>}, {pipeline_mode = #tpu.pipeline_mode<synchronous>, transform_indices = @transform_5, window_bounds = array<i64: 1, 128>}, {pipeline_mode = #tpu.pipeline_mode<synchronous>, transform_indices = @transform_6, window_bounds = array<i64: 128, 128>}, {pipeline_mode = #tpu.pipeline_mode<synchronous>, transform_indices = @transform_7, window_bounds = array<i64: 1, 128>}, {pipeline_mode = #tpu.pipeline_mode<synchronous>, transform_indices = @transform_8, window_bounds = array<i64: 128, 128>}, {pipeline_mode = #tpu.pipeline_mode<synchronous>, transform_indices = @transform_9, window_bounds = array<i64: 1, 128>}, {pipeline_mode = #tpu.pipeline_mode<synchronous>, transform_indices = @transform_10, window_bounds = array<i64: 128, 128>}, {pipeline_mode = #tpu.pipeline_mode<synchronous>, transform_indices = @transform_11, window_bounds = array<i64: 1, 128>}, {pipeline_mode = #tpu.pipeline_mode<synchronous>, transform_indices = @transform_12, window_bounds = array<i64: 128, 128>}, {pipeline_mode = #tpu.pipeline_mode<synchronous>, transform_indices = @transform_13, window_bounds = array<i64: 1, 128>}, {pipeline_mode = #tpu.pipeline_mode<synchronous>, transform_indices = @transform_14, window_bounds = array<i64: 128, 128>}, {pipeline_mode = #tpu.pipeline_mode<synchronous>, transform_indices = @transform_15, window_bounds = array<i64: 1, 128>}, {transform_indices = @transform_16, window_bounds = array<i64: 8, 128>}]} {
    %c0 = arith.constant 0 : index
    %c0_0 = arith.constant 0 : index
    %0 = vector.load %arg2[%c0, %c0_0] : memref<8x256xf32, #tpu.memory_space<vmem>>, vector<8x256xf32>
    %c0_1 = arith.constant 0 : index
    %c0_2 = arith.constant 0 : index
    %1 = vector.load %arg3[%c0_1, %c0_2] : memref<256x384xf32, #tpu.memory_space<vmem>>, vector<256x384xf32>
    %cst = arith.constant dense<0.000000e+00> : vector<8x384xf32>
    %2 = tpu.matmul %0, %1, %cst {dimension_numbers = #tpu.dot_dimension_numbers<[1], [0], [0], [1], [0, 0, 1, 1], [], []>} : vector<8x256xf32>, vector<256x384xf32>, vector<8x384xf32> -> vector<8x384xf32>
    %c0_3 = arith.constant 0 : index
    %c0_4 = arith.constant 0 : index
    %3 = vector.load %arg4[%c0_3, %c0_4] : memref<1x384xf32, #tpu.memory_space<vmem>>, vector<1x384xf32>
    %4 = vector.broadcast %3 : vector<1x384xf32> to vector<8x384xf32>
    %5 = arith.addf %2, %4 : vector<8x384xf32>
    %6 = arith.negf %5 : vector<8x384xf32>
    %7 = math.exp %6 : vector<8x384xf32>
    %cst_5 = arith.constant 1.000000e+00 : f32
    %8 = vector.broadcast %cst_5 : f32 to vector<8x384xf32>
    %9 = arith.addf %8, %7 : vector<8x384xf32>
    %10 = arith.divf %8, %9 : vector<8x384xf32>
    %11 = arith.mulf %5, %10 : vector<8x384xf32>
    %12 = vector.extract_strided_slice %11 {offsets = [0, 0], sizes = [8, 128], strides = [1, 1]} : vector<8x384xf32> to vector<8x128xf32>
    %c0_6 = arith.constant 0 : index
    %c0_7 = arith.constant 0 : index
    %13 = vector.load %arg7[%c0_6, %c0_7] : memref<128x128xf32, #tpu.memory_space<vmem>>, vector<128x128xf32>
    %cst_8 = arith.constant dense<0.000000e+00> : vector<8x128xf32>
    %14 = tpu.matmul %12, %13, %cst_8 {dimension_numbers = #tpu.dot_dimension_numbers<[1], [0], [0], [1], [0, 0, 1, 1], [], []>} : vector<8x128xf32>, vector<128x128xf32>, vector<8x128xf32> -> vector<8x128xf32>
    %c0_9 = arith.constant 0 : index
    %c0_10 = arith.constant 0 : index
    %15 = vector.load %arg8[%c0_9, %c0_10] : memref<1x128xf32, #tpu.memory_space<vmem>>, vector<1x128xf32>
    %16 = vector.broadcast %15 : vector<1x128xf32> to vector<8x128xf32>
    %17 = arith.addf %14, %16 : vector<8x128xf32>
    %18 = vector.extract_strided_slice %11 {offsets = [0, 128], sizes = [8, 128], strides = [1, 1]} : vector<8x384xf32> to vector<8x128xf32>
    %c0_11 = arith.constant 0 : index
    %c0_12 = arith.constant 0 : index
    %19 = vector.load %arg11[%c0_11, %c0_12] : memref<128x128xf32, #tpu.memory_space<vmem>>, vector<128x128xf32>
    %cst_13 = arith.constant dense<0.000000e+00> : vector<8x128xf32>
    %20 = tpu.matmul %18, %19, %cst_13 {dimension_numbers = #tpu.dot_dimension_numbers<[1], [0], [0], [1], [0, 0, 1, 1], [], []>} : vector<8x128xf32>, vector<128x128xf32>, vector<8x128xf32> -> vector<8x128xf32>
    %c0_14 = arith.constant 0 : index
    %c0_15 = arith.constant 0 : index
    %21 = vector.load %arg12[%c0_14, %c0_15] : memref<1x128xf32, #tpu.memory_space<vmem>>, vector<1x128xf32>
    %22 = vector.broadcast %21 : vector<1x128xf32> to vector<8x128xf32>
    %23 = arith.addf %20, %22 : vector<8x128xf32>
    %24 = vector.extract_strided_slice %11 {offsets = [0, 256], sizes = [8, 128], strides = [1, 1]} : vector<8x384xf32> to vector<8x128xf32>
    %c0_16 = arith.constant 0 : index
    %c0_17 = arith.constant 0 : index
    %25 = vector.load %arg15[%c0_16, %c0_17] : memref<128x128xf32, #tpu.memory_space<vmem>>, vector<128x128xf32>
    %cst_18 = arith.constant dense<0.000000e+00> : vector<8x128xf32>
    %26 = tpu.matmul %24, %25, %cst_18 {dimension_numbers = #tpu.dot_dimension_numbers<[1], [0], [0], [1], [0, 0, 1, 1], [], []>} : vector<8x128xf32>, vector<128x128xf32>, vector<8x128xf32> -> vector<8x128xf32>
    %c0_19 = arith.constant 0 : index
    %c0_20 = arith.constant 0 : index
    %27 = vector.load %arg16[%c0_19, %c0_20] : memref<1x128xf32, #tpu.memory_space<vmem>>, vector<1x128xf32>
    %28 = vector.broadcast %27 : vector<1x128xf32> to vector<8x128xf32>
    %29 = arith.addf %26, %28 : vector<8x128xf32>
    %c0_21 = arith.constant 0 : index
    %c0_22 = arith.constant 0 : index
    %30 = vector.load %arg1[%c0_21, %c0_22] : memref<8x128xf32, #tpu.memory_space<vmem>>, vector<8x128xf32>
    %c0_23 = arith.constant 0 : index
    %c0_24 = arith.constant 0 : index
    %31 = vector.load %arg5[%c0_23, %c0_24] : memref<128x128xf32, #tpu.memory_space<vmem>>, vector<128x128xf32>
    %cst_25 = arith.constant dense<0.000000e+00> : vector<8x128xf32>
    %32 = tpu.matmul %30, %31, %cst_25 {dimension_numbers = #tpu.dot_dimension_numbers<[1], [0], [0], [1], [0, 0, 1, 1], [], []>} : vector<8x128xf32>, vector<128x128xf32>, vector<8x128xf32> -> vector<8x128xf32>
    %c0_26 = arith.constant 0 : index
    %c0_27 = arith.constant 0 : index
    %33 = vector.load %arg6[%c0_26, %c0_27] : memref<1x128xf32, #tpu.memory_space<vmem>>, vector<1x128xf32>
    %34 = vector.broadcast %33 : vector<1x128xf32> to vector<8x128xf32>
    %35 = arith.addf %32, %34 : vector<8x128xf32>
    %36 = arith.mulf %17, %35 : vector<8x128xf32>
    %cst_28 = arith.constant 0.000000e+00 : f32
    %37 = vector.broadcast %cst_28 : f32 to vector<8x128xf32>
    %38 = arith.maximumf %36, %37 : vector<8x128xf32>
    %c0_29 = arith.constant 0 : index
    %c0_30 = arith.constant 0 : index
    %39 = vector.load %arg9[%c0_29, %c0_30] : memref<128x128xf32, #tpu.memory_space<vmem>>, vector<128x128xf32>
    %cst_31 = arith.constant dense<0.000000e+00> : vector<8x128xf32>
    %40 = tpu.matmul %38, %39, %cst_31 {dimension_numbers = #tpu.dot_dimension_numbers<[1], [0], [0], [1], [0, 0, 1, 1], [], []>} : vector<8x128xf32>, vector<128x128xf32>, vector<8x128xf32> -> vector<8x128xf32>
    %c0_32 = arith.constant 0 : index
    %c0_33 = arith.constant 0 : index
    %41 = vector.load %arg10[%c0_32, %c0_33] : memref<1x128xf32, #tpu.memory_space<vmem>>, vector<1x128xf32>
    %42 = vector.broadcast %41 : vector<1x128xf32> to vector<8x128xf32>
    %43 = arith.addf %40, %42 : vector<8x128xf32>
    %44 = arith.mulf %23, %43 : vector<8x128xf32>
    %cst_34 = arith.constant 0.000000e+00 : f32
    %45 = vector.broadcast %cst_34 : f32 to vector<8x128xf32>
    %46 = arith.maximumf %44, %45 : vector<8x128xf32>
    %c0_35 = arith.constant 0 : index
    %c0_36 = arith.constant 0 : index
    %47 = vector.load %arg13[%c0_35, %c0_36] : memref<128x128xf32, #tpu.memory_space<vmem>>, vector<128x128xf32>
    %cst_37 = arith.constant dense<0.000000e+00> : vector<8x128xf32>
    %48 = tpu.matmul %46, %47, %cst_37 {dimension_numbers = #tpu.dot_dimension_numbers<[1], [0], [0], [1], [0, 0, 1, 1], [], []>} : vector<8x128xf32>, vector<128x128xf32>, vector<8x128xf32> -> vector<8x128xf32>
    %c0_38 = arith.constant 0 : index
    %c0_39 = arith.constant 0 : index
    %49 = vector.load %arg14[%c0_38, %c0_39] : memref<1x128xf32, #tpu.memory_space<vmem>>, vector<1x128xf32>
    %50 = vector.broadcast %49 : vector<1x128xf32> to vector<8x128xf32>
    %51 = arith.addf %48, %50 : vector<8x128xf32>
    %52 = arith.mulf %29, %51 : vector<8x128xf32>
    %c0_40 = arith.constant 0 : index
    %c0_41 = arith.constant 0 : index
    %53 = vector.load %arg17[%c0_40, %c0_41] : memref<8x128xf32, #tpu.memory_space<vmem>>, vector<8x128xf32>
    tpu.vector_store %arg17[%c0_40, %c0_41], %52 {strides = array<i32>} : memref<8x128xf32, #tpu.memory_space<vmem>>, vector<8x128xf32>,
    return
  }
  func.func @transform_0(%arg0: i32) -> (i32, i32) {
    %c0_i32 = arith.constant 0 : i32
    %c0_i32_0 = arith.constant 0 : i32
    return %arg0, %c0_i32 : i32, i32
  }
  func.func @transform_1(%arg0: i32) -> (i32, i32) {
    %c0_i32 = arith.constant 0 : i32
    %c0_i32_0 = arith.constant 0 : i32
    return %arg0, %c0_i32 : i32, i32
  }
  func.func @transform_2(%arg0: i32) -> (i32, i32) {
    %c0_i32 = arith.constant 0 : i32
    %c0_i32_0 = arith.constant 0 : i32
    %c0_i32_1 = arith.constant 0 : i32
    return %c0_i32, %c0_i32_0 : i32, i32
  }
  func.func @transform_3(%arg0: i32) -> (i32, i32) {
    %c0_i32 = arith.constant 0 : i32
    %c0_i32_0 = arith.constant 0 : i32
    %c0_i32_1 = arith.constant 0 : i32
    return %c0_i32, %c0_i32_0 : i32, i32
  }
  func.func @transform_4(%arg0: i32) -> (i32, i32) {
    %c0_i32 = arith.constant 0 : i32
    %c0_i32_0 = arith.constant 0 : i32
    %c0_i32_1 = arith.constant 0 : i32
    return %c0_i32, %c0_i32_0 : i32, i32
  }
  func.func @transform_5(%arg0: i32) -> (i32, i32) {
    %c0_i32 = arith.constant 0 : i32
    %c0_i32_0 = arith.constant 0 : i32
    %c0_i32_1 = arith.constant 0 : i32
    return %c0_i32, %c0_i32_0 : i32, i32
  }
  func.func @transform_6(%arg0: i32) -> (i32, i32) {
    %c0_i32 = arith.constant 0 : i32
    %c0_i32_0 = arith.constant 0 : i32
    %c0_i32_1 = arith.constant 0 : i32
    return %c0_i32, %c0_i32_0 : i32, i32
  }
  func.func @transform_7(%arg0: i32) -> (i32, i32) {
    %c0_i32 = arith.constant 0 : i32
    %c0_i32_0 = arith.constant 0 : i32
    %c0_i32_1 = arith.constant 0 : i32
    return %c0_i32, %c0_i32_0 : i32, i32
  }
  func.func @transform_8(%arg0: i32) -> (i32, i32) {
    %c0_i32 = arith.constant 0 : i32
    %c0_i32_0 = arith.constant 0 : i32
    %c0_i32_1 = arith.constant 0 : i32
    return %c0_i32, %c0_i32_0 : i32, i32
  }
  func.func @transform_9(%arg0: i32) -> (i32, i32) {
    %c0_i32 = arith.constant 0 : i32
    %c0_i32_0 = arith.constant 0 : i32
    %c0_i32_1 = arith.constant 0 : i32
    return %c0_i32, %c0_i32_0 : i32, i32
  }
  func.func @transform_10(%arg0: i32) -> (i32, i32) {
    %c0_i32 = arith.constant 0 : i32
    %c0_i32_0 = arith.constant 0 : i32
    %c0_i32_1 = arith.constant 0 : i32
    return %c0_i32, %c0_i32_0 : i32, i32
  }
  func.func @transform_11(%arg0: i32) -> (i32, i32) {
    %c0_i32 = arith.constant 0 : i32
    %c0_i32_0 = arith.constant 0 : i32
    %c0_i32_1 = arith.constant 0 : i32
    return %c0_i32, %c0_i32_0 : i32, i32
  }
  func.func @transform_12(%arg0: i32) -> (i32, i32) {
    %c0_i32 = arith.constant 0 : i32
    %c0_i32_0 = arith.constant 0 : i32
    %c0_i32_1 = arith.constant 0 : i32
    return %c0_i32, %c0_i32_0 : i32, i32
  }
  func.func @transform_13(%arg0: i32) -> (i32, i32) {
    %c0_i32 = arith.constant 0 : i32
    %c0_i32_0 = arith.constant 0 : i32
    %c0_i32_1 = arith.constant 0 : i32
    return %c0_i32, %c0_i32_0 : i32, i32
  }
  func.func @transform_14(%arg0: i32) -> (i32, i32) {
    %c0_i32 = arith.constant 0 : i32
    %c0_i32_0 = arith.constant 0 : i32
    %c0_i32_1 = arith.constant 0 : i32
    return %c0_i32, %c0_i32_0 : i32, i32
  }
  func.func @transform_15(%arg0: i32) -> (i32, i32) {
    %c0_i32 = arith.constant 0 : i32
    %c0_i32_0 = arith.constant 0 : i32
    %c0_i32_1 = arith.constant 0 : i32
    return %c0_i32, %c0_i32_0 : i32, i32
  }
  func.func @transform_16(%arg0: i32) -> (i32, i32) {
    %c0_i32 = arith.constant 0 : i32
    %c0_i32_0 = arith.constant 0 : i32
    return %arg0, %c0_i32 : i32, i32
  }
}

</mosaic_0001>

<llo_original>
// kernel: forward_impl.1
$region0: #{forward_impl.1}
  #allocation0 [shape = 'u32[]', space=smem, size = 0x4, offset = 0x4, fixed_abs, tag = 'smem constant byte address 0x4 - core index']
  #allocation1 [shape = 'u32[144,128]{1,0:T(1,128)}', space=vmem, size = 0x12000, scoped, tag = 'internal scratch']
  %s0 = inlined_call_operand.vmem [shape: f32[8,128], index: 0, kind: input, shape index: {}]
  %s1 = inlined_call_operand.vmem [shape: f32[8,256], index: 1, kind: input, shape index: {}]
  %s2 = inlined_call_operand.hbm [shape: f32[256,384], index: 2, kind: input, shape index: {}]
  %s3 = inlined_call_operand.vmem [shape: f32[1,384], index: 3, kind: input, shape index: {}]
  %s4 = inlined_call_operand.vmem [shape: f32[128,128], index: 4, kind: input, shape index: {}]
  %s5 = inlined_call_operand.vmem [shape: f32[1,128], index: 5, kind: input, shape index: {}]
  %s6 = inlined_call_operand.hbm [shape: f32[128,128], index: 6, kind: input, shape index: {}]
  %s7 = inlined_call_operand.vmem [shape: f32[1,128], index: 7, kind: input, shape index: {}]
  %s8 = inlined_call_operand.hbm [shape: f32[128,128], index: 8, kind: input, shape index: {}]
  %s9 = inlined_call_operand.vmem [shape: f32[1,128], index: 9, kind: input, shape index: {}]
  %s10 = inlined_call_operand.hbm [shape: f32[128,128], index: 10, kind: input, shape index: {}]
  %s11 = inlined_call_operand.vmem [shape: f32[1,128], index: 11, kind: input, shape index: {}]
  %s12 = inlined_call_operand.hbm [shape: f32[128,128], index: 12, kind: input, shape index: {}]
  %s13 = inlined_call_operand.vmem [shape: f32[1,128], index: 13, kind: input, shape index: {}]
  %s14 = inlined_call_operand.hbm [shape: f32[128,128], index: 14, kind: input, shape index: {}]
  %s15 = inlined_call_operand.vmem [shape: f32[1,128], index: 15, kind: input, shape index: {}]
  %s16 = inlined_call_operand.vmem [shape: f32[8,128], index: 16, kind: output, shape index: {}]
  %s17 = sld [smem:[#allocation0]]
  $region98: #{forward_impl.1} parent=0
    _
  %s19 = ssub.s32 1, %s17
  %s20 = scalar_select 0, %s19, %s17
  $region1: #{forward_impl.1} parent=0
    #allocation2 [shape = 'u8[393216]{0}', space=vmem, size = 0x60000, scoped, tag = 'input window, operand 2, single buffered']
    #allocation3 [shape = 's32[1]{0}', space=sflag, size = 0x4, scoped, tag = 'scoped memory for forward_impl.1']
    #allocation4 [shape = 'u8[65536]{0}', space=vmem, size = 0x10000, scoped, tag = 'input window, operand 6, single buffered']
    #allocation5 [shape = 's32[1]{0}', space=sflag, size = 0x4, scoped, tag = 'scoped memory for forward_impl.1']
    #allocation6 [shape = 'u8[65536]{0}', space=vmem, size = 0x10000, scoped, tag = 'input window, operand 8, single buffered']
    #allocation7 [shape = 'u8[65536]{0}', space=vmem, size = 0x10000, scoped, tag = 'input window, operand 10, single buffered']
    #allocation8 [shape = 's32[1]{0}', space=sflag, size = 0x4, scoped, tag = 'scoped memory for forward_impl.1']
    #allocation9 [shape = 'u8[65536]{0}', space=vmem, size = 0x10000, scoped, tag = 'input window, operand 12, single buffered']
    #allocation10 [shape = 'u8[65536]{0}', space=vmem, size = 0x10000, scoped, tag = 'input window, operand 14, single buffered']
    #allocation11 [shape = 's32[1]{0}', space=sflag, size = 0x4, scoped, tag = 'scoped memory for forward_impl.1']
    %21 = vsyncpa [#allocation3], 0
    %22 = vsyncpa [#allocation5], 0
    %23 = vsyncpa [#allocation8], 0
    %24 = vsyncpa [#allocation11], 0
    // Predicated region
    $region2: #{forward_impl.1} parent=1 // pred_check
      _
    $region3: #{forward_impl.1} parent=1 // pred_check_branch
      %26 = sbr.rel (0) target = $region5
    $region4: #{forward_impl.1} parent=1 // pred_region
      _
    $region5: #{forward_impl.1} parent=1 // pred_fallthru
      _
    // Predicated region
    $region6: #{forward_impl.1} parent=1 // pred_check
      _
    $region7: #{forward_impl.1} parent=1 // pred_check_branch
      %28 = sbr.rel (0) target = $region9
    $region8: #{forward_impl.1} parent=1 // pred_region
      _
    $region9: #{forward_impl.1} parent=1 // pred_fallthru
      _
    // Predicated region
    $region10: #{forward_impl.1} parent=1 // pred_check
      _
    $region11: #{forward_impl.1} parent=1 // pred_check_branch
      %30 = sbr.rel (0) target = $region13
    $region12: #{forward_impl.1} parent=1 // pred_region
      %s32 = ssub.s32 12288, 12288
      %33 = vsyncadd [#allocation3], %s32
      %s34 = sshll.u32 [#allocation2], 4
      %s35 = int_to_ptr.vmem [resolvable:$true] %s34
      %40 = dma.hbm_to_vmem [thread:$0]  %s2, 12288, %s35, [#allocation3], 384, 384, 24
    $region13: #{forward_impl.1} parent=1 // pred_fallthru
      _
    // Predicated region
    $region14: #{forward_impl.1} parent=1 // pred_check
      _
    $region15: #{forward_impl.1} parent=1 // pred_check_branch
      %42 = sbr.rel (0) target = $region17
    $region16: #{forward_impl.1} parent=1 // pred_region
      _
    $region17: #{forward_impl.1} parent=1 // pred_fallthru
      _
    // Predicated region
    $region18: #{forward_impl.1} parent=1 // pred_check
      _
    $region19: #{forward_impl.1} parent=1 // pred_check_branch
      %44 = sbr.rel (0) target = $region21
    $region20: #{forward_impl.1} parent=1 // pred_region
      _
    $region21: #{forward_impl.1} parent=1 // pred_fallthru
      _
    // Predicated region
    $region22: #{forward_impl.1} parent=1 // pred_check
      _
    $region23: #{forward_impl.1} parent=1 // pred_check_branch
      %46 = sbr.rel (0) target = $region25
    $region24: #{forward_impl.1} parent=1 // pred_region
      _
    $region25: #{forward_impl.1} parent=1 // pred_fallthru
      _
    // Predicated region
    $region26: #{forward_impl.1} parent=1 // pred_check
      _
    $region27: #{forward_impl.1} parent=1 // pred_check_branch
      %48 = sbr.rel (0) target = $region29
    $region28: #{forward_impl.1} parent=1 // pred_region
      %s50 = ssub.s32 2048, 2048
      %51 = vsyncadd [#allocation5], %s50
      %s52 = sshll.u32 [#allocation4], 4
      %s53 = int_to_ptr.vmem [resolvable:$true] %s52
      %58 = dma.hbm_to_vmem [thread:$0]  %s6, 2048, %s53, [#allocation5], 128, 128, 8
    $region29: #{forward_impl.1} parent=1 // pred_fallthru
      _
    // Predicated region
    $region30: #{forward_impl.1} parent=1 // pred_check
      _
    $region31: #{forward_impl.1} parent=1 // pred_check_branch
      %60 = sbr.rel (0) target = $region33
    $region32: #{forward_impl.1} parent=1 // pred_region
      _
    $region33: #{forward_impl.1} parent=1 // pred_fallthru
      _
    // Predicated region
    $region34: #{forward_impl.1} parent=1 // pred_check
      _
    $region35: #{forward_impl.1} parent=1 // pred_check_branch
      %62 = sbr.rel (0) target = $region37
    $region36: #{forward_impl.1} parent=1 // pred_region
      %s64 = ssub.s32 2048, 2048
      %65 = vsyncadd [#allocation5], %s64
      %s66 = sshll.u32 [#allocation6], 4
      %s67 = int_to_ptr.vmem [resolvable:$true] %s66
      %72 = dma.hbm_to_vmem [thread:$0]  %s8, 2048, %s67, [#allocation5], 128, 128, 8
    $region37: #{forward_impl.1} parent=1 // pred_fallthru
      _
    // Predicated region
    $region38: #{forward_impl.1} parent=1 // pred_check
      _
    $region39: #{forward_impl.1} parent=1 // pred_check_branch
      %74 = sbr.rel (0) target = $region41
    $region40: #{forward_impl.1} parent=1 // pred_region
      _
    $region41: #{forward_impl.1} parent=1 // pred_fallthru
      _
    // Predicated region
    $region42: #{forward_impl.1} parent=1 // pred_check
      _
    $region43: #{forward_impl.1} parent=1 // pred_check_branch
      %76 = sbr.rel (0) target = $region45
    $region44: #{forward_impl.1} parent=1 // pred_region
      %s78 = ssub.s32 2048, 2048
      %79 = vsyncadd [#allocation8], %s78
      %s80 = sshll.u32 [#allocation7], 4
      %s81 = int_to_ptr.vmem [resolvable:$true] %s80
      %86 = dma.hbm_to_vmem [thread:$0]  %s10, 2048, %s81, [#allocation8], 128, 128, 8
    $region45: #{forward_impl.1} parent=1 // pred_fallthru
      _
    // Predicated region
    $region46: #{forward_impl.1} parent=1 // pred_check
      _
    $region47: #{forward_impl.1} parent=1 // pred_check_branch
      %88 = sbr.rel (0) target = $region49
    $region48: #{forward_impl.1} parent=1 // pred_region
      _
    $region49: #{forward_impl.1} parent=1 // pred_fallthru
      _
    // Predicated region
    $region50: #{forward_impl.1} parent=1 // pred_check
      _
    $region51: #{forward_impl.1} parent=1 // pred_check_branch
      %90 = sbr.rel (0) target = $region53
    $region52: #{forward_impl.1} parent=1 // pred_region
      %s92 = ssub.s32 2048, 2048
      %93 = vsyncadd [#allocation8], %s92
      %s94 = sshll.u32 [#allocation9], 4
      %s95 = int_to_ptr.vmem [resolvable:$true] %s94
      %100 = dma.hbm_to_vmem [thread:$0]  %s12, 2048, %s95, [#allocation8], 128, 128, 8
    $region53: #{forward_impl.1} parent=1 // pred_fallthru
      _
    // Predicated region
    $region54: #{forward_impl.1} parent=1 // pred_check
      _
    $region55: #{forward_impl.1} parent=1 // pred_check_branch
      %102 = sbr.rel (0) target = $region57
    $region56: #{forward_impl.1} parent=1 // pred_region
      _
    $region57: #{forward_impl.1} parent=1 // pred_fallthru
      _
    // Predicated region
    $region58: #{forward_impl.1} parent=1 // pred_check
      _
    $region59: #{forward_impl.1} parent=1 // pred_check_branch
      %104 = sbr.rel (0) target = $region61
    $region60: #{forward_impl.1} parent=1 // pred_region
      %s106 = ssub.s32 2048, 2048
      %107 = vsyncadd [#allocation11], %s106
      %s108 = sshll.u32 [#allocation10], 4
      %s109 = int_to_ptr.vmem [resolvable:$true] %s108
      %114 = dma.hbm_to_vmem [thread:$0]  %s14, 2048, %s109, [#allocation11], 128, 128, 8
    $region61: #{forward_impl.1} parent=1 // pred_fallthru
      _
    // Predicated region
    $region62: #{forward_impl.1} parent=1 // pred_check
      _
    $region63: #{forward_impl.1} parent=1 // pred_check_branch
      %116 = sbr.rel (0) target = $region65
    $region64: #{forward_impl.1} parent=1 // pred_region
      _
    $region65: #{forward_impl.1} parent=1 // pred_fallthru
      _
    // Predicated region
    $region66: #{forward_impl.1} parent=1 // pred_check
      _
    $region67: #{forward_impl.1} parent=1 // pred_check_branch
      %118 = sbr.rel (0) target = $region69
    $region68: #{forward_impl.1} parent=1 // pred_region
      %119 = dma.done [#allocation3], 12288
    $region69: #{forward_impl.1} parent=1 // pred_fallthru
      _
    // Predicated region
    $region70: #{forward_impl.1} parent=1 // pred_check
      _
    $region71: #{forward_impl.1} parent=1 // pred_check_branch
      %121 = sbr.rel (0) target = $region73
    $region72: #{forward_impl.1} parent=1 // pred_region
      %122 = dma.done [#allocation5], 2048
    $region73: #{forward_impl.1} parent=1 // pred_fallthru
      _
    // Predicated region
    $region74: #{forward_impl.1} parent=1 // pred_check
      _
    $region75: #{forward_impl.1} parent=1 // pred_check_branch
      %124 = sbr.rel (0) target = $region77
    $region76: #{forward_impl.1} parent=1 // pred_region
      %125 = dma.done [#allocation5], 2048
    $region77: #{forward_impl.1} parent=1 // pred_fallthru
      _
    // Predicated region
    $region78: #{forward_impl.1} parent=1 // pred_check
      _
    $region79: #{forward_impl.1} parent=1 // pred_check_branch
      %127 = sbr.rel (0) target = $region81
    $region80: #{forward_impl.1} parent=1 // pred_region
      %128 = dma.done [#allocation8], 2048
    $region81: #{forward_impl.1} parent=1 // pred_fallthru
      _
    // Predicated region
    $region82: #{forward_impl.1} parent=1 // pred_check
      _
    $region83: #{forward_impl.1} parent=1 // pred_check_branch
      %130 = sbr.rel (0) target = $region85
    $region84: #{forward_impl.1} parent=1 // pred_region
      %131 = dma.done [#allocation8], 2048
    $region85: #{forward_impl.1} parent=1 // pred_fallthru
      _
    // Predicated region
    $region86: #{forward_impl.1} parent=1 // pred_check
      _
    $region87: #{forward_impl.1} parent=1 // pred_check_branch
      %133 = sbr.rel (0) target = $region89
    $region88: #{forward_impl.1} parent=1 // pred_region
      %134 = dma.done [#allocation11], 2048
    $region89: #{forward_impl.1} parent=1 // pred_fallthru
      _
    %v135 = vld [vmem:[%s1] sm:$0xff]
    %v136 = vld [vmem:[%s1 + $0x8] sm:$0xff]
    %v137 = vld [vmem:[#allocation2] sm:$0xff]
    %v138 = vld [vmem:[#allocation2 + $0x8] sm:$0xff]
    %v139 = vld [vmem:[#allocation2 + $0x10] sm:$0xff]
    %v140 = vld [vmem:[#allocation2 + $0x18] sm:$0xff]
    %v141 = vld [vmem:[#allocation2 + $0x20] sm:$0xff]
    %v142 = vld [vmem:[#allocation2 + $0x28] sm:$0xff]
    %v143 = vld [vmem:[#allocation2 + $0x30] sm:$0xff]
    %v144 = vld [vmem:[#allocation2 + $0x38] sm:$0xff]
    %v145 = vld [vmem:[#allocation2 + $0x40] sm:$0xff]
    %v146 = vld [vmem:[#allocation2 + $0x48] sm:$0xff]
    %v147 = vld [vmem:[#allocation2 + $0x50] sm:$0xff]
    %v148 = vld [vmem:[#allocation2 + $0x58] sm:$0xff]
    %v149 = vld [vmem:[#allocation2 + $0x60] sm:$0xff]
    %v150 = vld [vmem:[#allocation2 + $0x68] sm:$0xff]
    %v151 = vld [vmem:[#allocation2 + $0x70] sm:$0xff]
    %v152 = vld [vmem:[#allocation2 + $0x78] sm:$0xff]
    %v153 = vld [vmem:[#allocation2 + $0x80] sm:$0xff]
    %v154 = vld [vmem:[#allocation2 + $0x88] sm:$0xff]
    %v155 = vld [vmem:[#allocation2 + $0x90] sm:$0xff]
    %v156 = vld [vmem:[#allocation2 + $0x98] sm:$0xff]
    %v157 = vld [vmem:[#allocation2 + $0xa0] sm:$0xff]
    %v158 = vld [vmem:[#allocation2 + $0xa8] sm:$0xff]
    %v159 = vld [vmem:[#allocation2 + $0xb0] sm:$0xff]
    %v160 = vld [vmem:[#allocation2 + $0xb8] sm:$0xff]
    %v161 = vld [vmem:[#allocation2 + $0xc0] sm:$0xff]
    %v162 = vld [vmem:[#allocation2 + $0xc8] sm:$0xff]
    %v163 = vld [vmem:[#allocation2 + $0xd0] sm:$0xff]
    %v164 = vld [vmem:[#allocation2 + $0xd8] sm:$0xff]
    %v165 = vld [vmem:[#allocation2 + $0xe0] sm:$0xff]
    %v166 = vld [vmem:[#allocation2 + $0xe8] sm:$0xff]
    %v167 = vld [vmem:[#allocation2 + $0xf0] sm:$0xff]
    %v168 = vld [vmem:[#allocation2 + $0xf8] sm:$0xff]
    %v169 = vld [vmem:[#allocation2 + $0x100] sm:$0xff]
    %v170 = vld [vmem:[#allocation2 + $0x108] sm:$0xff]
    %v171 = vld [vmem:[#allocation2 + $0x110] sm:$0xff]
    %v172 = vld [vmem:[#allocation2 + $0x118] sm:$0xff]
    %v173 = vld [vmem:[#allocation2 + $0x120] sm:$0xff]
    %v174 = vld [vmem:[#allocation2 + $0x128] sm:$0xff]
    %v175 = vld [vmem:[#allocation2 + $0x130] sm:$0xff]
    %v176 = vld [vmem:[#allocation2 + $0x138] sm:$0xff]
    %v177 = vld [vmem:[#allocation2 + $0x140] sm:$0xff]
    %v178 = vld [vmem:[#allocation2 + $0x148] sm:$0xff]
    %v179 = vld [vmem:[#allocation2 + $0x150] sm:$0xff]
    %v180 = vld [vmem:[#allocation2 + $0x158] sm:$0xff]
    %v181 = vld [vmem:[#allocation2 + $0x160] sm:$0xff]
    %v182 = vld [vmem:[#allocation2 + $0x168] sm:$0xff]
    %v183 = vld [vmem:[#allocation2 + $0x170] sm:$0xff]
    %v184 = vld [vmem:[#allocation2 + $0x178] sm:$0xff]
    %v185 = vld [vmem:[#allocation2 + $0x180] sm:$0xff]
    %v186 = vld [vmem:[#allocation2 + $0x188] sm:$0xff]
    %v187 = vld [vmem:[#allocation2 + $0x190] sm:$0xff]
    %v188 = vld [vmem:[#allocation2 + $0x198] sm:$0xff]
    %v189 = vld [vmem:[#allocation2 + $0x1a0] sm:$0xff]
    %v190 = vld [vmem:[#allocation2 + $0x1a8] sm:$0xff]
    %v191 = vld [vmem:[#allocation2 + $0x1b0] sm:$0xff]
    %v192 = vld [vmem:[#allocation2 + $0x1b8] sm:$0xff]
    %v193 = vld [vmem:[#allocation2 + $0x1c0] sm:$0xff]
    %v194 = vld [vmem:[#allocation2 + $0x1c8] sm:$0xff]
    %v195 = vld [vmem:[#allocation2 + $0x1d0] sm:$0xff]
    %v196 = vld [vmem:[#allocation2 + $0x1d8] sm:$0xff]
    %v197 = vld [vmem:[#allocation2 + $0x1e0] sm:$0xff]
    %v198 = vld [vmem:[#allocation2 + $0x1e8] sm:$0xff]
    %v199 = vld [vmem:[#allocation2 + $0x1f0] sm:$0xff]
    %v200 = vld [vmem:[#allocation2 + $0x1f8] sm:$0xff]
    %v201 = vld [vmem:[#allocation2 + $0x200] sm:$0xff]
    %v202 = vld [vmem:[#allocation2 + $0x208] sm:$0xff]
    %v203 = vld [vmem:[#allocation2 + $0x210] sm:$0xff]
    %v204 = vld [vmem:[#allocation2 + $0x218] sm:$0xff]
    %v205 = vld [vmem:[#allocation2 + $0x220] sm:$0xff]
    %v206 = vld [vmem:[#allocation2 + $0x228] sm:$0xff]
    %v207 = vld [vmem:[#allocation2 + $0x230] sm:$0xff]
    %v208 = vld [vmem:[#allocation2 + $0x238] sm:$0xff]
    %v209 = vld [vmem:[#allocation2 + $0x240] sm:$0xff]
    %v210 = vld [vmem:[#allocation2 + $0x248] sm:$0xff]
    %v211 = vld [vmem:[#allocation2 + $0x250] sm:$0xff]
    %v212 = vld [vmem:[#allocation2 + $0x258] sm:$0xff]
    %v213 = vld [vmem:[#allocation2 + $0x260] sm:$0xff]
    %v214 = vld [vmem:[#allocation2 + $0x268] sm:$0xff]
    %v215 = vld [vmem:[#allocation2 + $0x270] sm:$0xff]
    %v216 = vld [vmem:[#allocation2 + $0x278] sm:$0xff]
    %v217 = vld [vmem:[#allocation2 + $0x280] sm:$0xff]
    %v218 = vld [vmem:[#allocation2 + $0x288] sm:$0xff]
    %v219 = vld [vmem:[#allocation2 + $0x290] sm:$0xff]
    %v220 = vld [vmem:[#allocation2 + $0x298] sm:$0xff]
    %v221 = vld [vmem:[#allocation2 + $0x2a0] sm:$0xff]
    %v222 = vld [vmem:[#allocation2 + $0x2a8] sm:$0xff]
    %v223 = vld [vmem:[#allocation2 + $0x2b0] sm:$0xff]
    %v224 = vld [vmem:[#allocation2 + $0x2b8] sm:$0xff]
    %v225 = vld [vmem:[#allocation2 + $0x2c0] sm:$0xff]
    %v226 = vld [vmem:[#allocation2 + $0x2c8] sm:$0xff]
    %v227 = vld [vmem:[#allocation2 + $0x2d0] sm:$0xff]
    %v228 = vld [vmem:[#allocation2 + $0x2d8] sm:$0xff]
    %v229 = vld [vmem:[#allocation2 + $0x2e0] sm:$0xff]
    %v230 = vld [vmem:[#allocation2 + $0x2e8] sm:$0xff]
    %v231 = vld [vmem:[#allocation2 + $0x2f0] sm:$0xff]
    %v232 = vld [vmem:[#allocation2 + $0x2f8] sm:$0xff]
    %v233 = vld [vmem:[%s3] sm:$0x7]
    %v235 = vlaneseq
    %v236 = vshrl.u32 %v235, 7
    %v237 = vsub.s32 0, %v236
    %v238 = vrot.slane %v233, %v237
    %v239 = vlaneseq
    %v240 = vshrl.u32 %v239, 7
    %v241 = vsub.s32 1, %v240
    %v242 = vrot.slane %v233, %v241
    %v243 = vlaneseq
    %v244 = vshrl.u32 %v243, 7
    %v245 = vsub.s32 2, %v244
    %v246 = vrot.slane %v233, %v245
    %250 = vmatprep.subr.mxu0 %v138
    %251 = vmatpush1.msra.mxu0 %v137
    %252 = vmatprep.subr.mxu0 %v141
    %253 = vmatpush1.msra.mxu0 %v140
    %254 = vmatprep.subr.mxu0 %v144
    %255 = vmatpush1.msra.mxu0 %v143
    %256 = vmatprep.subr.mxu0 %v147
    %257 = vmatpush1.msra.mxu0 %v146
    %258 = vmatprep.subr.mxu0 %v150
    %259 = vmatpush1.msra.mxu0 %v149
    %260 = vmatprep.subr.mxu0 %v153
    %261 = vmatpush1.msra.mxu0 %v152
    %262 = vmatprep.subr.mxu0 %v156
    %263 = vmatpush1.msra.mxu0 %v155
    %264 = vmatprep.subr.mxu0 %v159
    %265 = vmatpush1.msra.mxu0 %v158
    %266 = vmatprep.subr.mxu0 %v162
    %267 = vmatpush1.msra.mxu0 %v161
    %268 = vmatprep.subr.mxu0 %v165
    %269 = vmatpush1.msra.mxu0 %v164
    %270 = vmatprep.subr.mxu0 %v168
    %271 = vmatpush1.msra.mxu0 %v167
    %272 = vmatprep.subr.mxu0 %v171
    %273 = vmatpush1.msra.mxu0 %v170
    %274 = vmatprep.subr.mxu0 %v174
    %275 = vmatpush1.msra.mxu0 %v173
    %276 = vmatprep.subr.mxu0 %v177
    %277 = vmatpush1.msra.mxu0 %v176
    %278 = vmatprep.subr.mxu0 %v180
    %279 = vmatpush1.msra.mxu0 %v179
    %280 = vmatprep.subr.mxu0 %v183
    %281 = vmatpush1.msra.mxu0 %v182
    %282 = vmatprep.subr.mxu0 %v186
    %283 = vmatpush1.msra.mxu0 %v185
    %284 = vmatprep.subr.mxu0 %v189
    %285 = vmatpush1.msra.mxu0 %v188
    %286 = vmatprep.subr.mxu0 %v192
    %287 = vmatpush1.msra.mxu0 %v191
    %288 = vmatprep.subr.mxu0 %v195
    %289 = vmatpush1.msra.mxu0 %v194
    %290 = vmatprep.subr.mxu0 %v198
    %291 = vmatpush1.msra.mxu0 %v197
    %292 = vmatprep.subr.mxu0 %v201
    %293 = vmatpush1.msra.mxu0 %v200
    %294 = vmatprep.subr.mxu0 %v204
    %295 = vmatpush1.msra.mxu0 %v203
    %296 = vmatprep.subr.mxu0 %v207
    %297 = vmatpush1.msra.mxu0 %v206
    %298 = vmatprep.subr.mxu0 %v210
    %299 = vmatpush1.msra.mxu0 %v209
    %300 = vmatprep.subr.mxu0 %v213
    %301 = vmatpush1.msra.mxu0 %v212
    %302 = vmatprep.subr.mxu0 %v216
    %303 = vmatpush1.msra.mxu0 %v215
    %304 = vmatprep.subr.mxu0 %v219
    %305 = vmatpush1.msra.mxu0 %v218
    %306 = vmatprep.subr.mxu0 %v222
    %307 = vmatpush1.msra.mxu0 %v221
    %308 = vmatprep.subr.mxu0 %v225
    %309 = vmatpush1.msra.mxu0 %v224
    %310 = vmatprep.subr.mxu0 %v228
    %311 = vmatpush1.msra.mxu0 %v227
    %312 = vmatprep.subr.mxu0 %v231
    %313 = vmatpush1.msra.mxu0 %v230
    %314 = vmatprep.mubr.f32.mxu0 %v136
    %315 = vmatmul.mubr.f32.gmra.mrb[0].mxu0 %v135
    %v316 = vpop.f32.mrb[0].mxu0
    %v317 = vadd.f32 %v238, %v316
    %v318 = vpop.f32.mrb[0].mxu0
    %v319 = vadd.f32 %v242, %v318
    %320 = vdwg.mxu0
    %321 = vmatprep.subr.mxu0 0.0
    %322 = vmatpush1.msra.mxu0 %v139
    %323 = vmatprep.subr.mxu0 0.0
    %324 = vmatpush1.msra.mxu0 %v142
    %325 = vmatprep.subr.mxu0 0.0
    %326 = vmatpush1.msra.mxu0 %v145
    %327 = vmatprep.subr.mxu0 0.0
    %328 = vmatpush1.msra.mxu0 %v148
    %329 = vmatprep.subr.mxu0 0.0
    %330 = vmatpush1.msra.mxu0 %v151
    %331 = vmatprep.subr.mxu0 0.0
    %332 = vmatpush1.msra.mxu0 %v154
    %333 = vmatprep.subr.mxu0 0.0
    %334 = vmatpush1.msra.mxu0 %v157
    %335 = vmatprep.subr.mxu0 0.0
    %336 = vmatpush1.msra.mxu0 %v160
    %337 = vmatprep.subr.mxu0 0.0
    %338 = vmatpush1.msra.mxu0 %v163
    %339 = vmatprep.subr.mxu0 0.0
    %340 = vmatpush1.msra.mxu0 %v166
    %341 = vmatprep.subr.mxu0 0.0
    %342 = vmatpush1.msra.mxu0 %v169
    %343 = vmatprep.subr.mxu0 0.0
    %344 = vmatpush1.msra.mxu0 %v172
    %345 = vmatprep.subr.mxu0 0.0
    %346 = vmatpush1.msra.mxu0 %v175
    %347 = vmatprep.subr.mxu0 0.0
    %348 = vmatpush1.msra.mxu0 %v178
    %349 = vmatprep.subr.mxu0 0.0
    %350 = vmatpush1.msra.mxu0 %v181
    %351 = vmatprep.subr.mxu0 0.0
    %352 = vmatpush1.msra.mxu0 %v184
    %353 = vmatprep.subr.mxu0 0.0
    %354 = vmatpush1.msra.mxu0 %v187
    %355 = vmatprep.subr.mxu0 0.0
    %356 = vmatpush1.msra.mxu0 %v190
    %357 = vmatprep.subr.mxu0 0.0
    %358 = vmatpush1.msra.mxu0 %v193
    %359 = vmatprep.subr.mxu0 0.0
    %360 = vmatpush1.msra.mxu0 %v196
    %361 = vmatprep.subr.mxu0 0.0
    %362 = vmatpush1.msra.mxu0 %v199
    %363 = vmatprep.subr.mxu0 0.0
    %364 = vmatpush1.msra.mxu0 %v202
    %365 = vmatprep.subr.mxu0 0.0
    %366 = vmatpush1.msra.mxu0 %v205
    %367 = vmatprep.subr.mxu0 0.0
    %368 = vmatpush1.msra.mxu0 %v208
    %369 = vmatprep.subr.mxu0 0.0
    %370 = vmatpush1.msra.mxu0 %v211
    %371 = vmatprep.subr.mxu0 0.0
    %372 = vmatpush1.msra.mxu0 %v214
    %373 = vmatprep.subr.mxu0 0.0
    %374 = vmatpush1.msra.mxu0 %v217
    %375 = vmatprep.subr.mxu0 0.0
    %376 = vmatpush1.msra.mxu0 %v220
    %377 = vmatprep.subr.mxu0 0.0
    %378 = vmatpush1.msra.mxu0 %v223
    %379 = vmatprep.subr.mxu0 0.0
    %380 = vmatpush1.msra.mxu0 %v226
    %381 = vmatprep.subr.mxu0 0.0
    %382 = vmatpush1.msra.mxu0 %v229
    %383 = vmatprep.subr.mxu0 0.0
    %384 = vmatpush1.msra.mxu0 %v232
    %385 = vmatprep.mubr.f32.mxu0 %v136
    %386 = vmatmul.mubr.f32.gmra.mrb[0].mxu0 %v135
    %v387 = vpop.f32.mrb[0].mxu0
    %v388 = vadd.f32 %v246, %v387
    %v389 = vpop.f32.mrb[0].mxu0
    %390 = vdwg.mxu0
    %v391 = vxor.u32 %v317, 2147483648
    %v392 = vxor.u32 %v319, 2147483648
    %v393 = vxor.u32 %v388, 2147483648
    %v394 = vmul.f32 %v391, 1.442695
    %v395 = vpow.pop %v394
    %v396 = vmul.f32 %v392, 1.442695
    %v397 = vpow.pop %v396
    %v398 = vmul.f32 %v393, 1.442695
    %v399 = vpow.pop %v398
    %v400 = vadd.f32 %v395, 1.0
    %v401 = vadd.f32 %v397, 1.0
    %v402 = vadd.f32 %v399, 1.0
    %v403 = vrcp.pop %v400
    %v404 = vmul.f32 1.0, %v403
    %v405 = vrcp.pop %v401
    %v406 = vmul.f32 1.0, %v405
    %v407 = vrcp.pop %v402
    %v408 = vmul.f32 1.0, %v407
    %v409 = vmul.f32 %v317, %v404
    %v410 = vmul.f32 %v319, %v406
    %v411 = vmul.f32 %v388, %v408
    %v412 = vld [vmem:[#allocation4] sm:$0xff]
    %v413 = vld [vmem:[#allocation4 + $0x8] sm:$0xff]
    %v414 = vld [vmem:[#allocation4 + $0x10] sm:$0xff]
    %v415 = vld [vmem:[#allocation4 + $0x18] sm:$0xff]
    %v416 = vld [vmem:[#allocation4 + $0x20] sm:$0xff]
    %v417 = vld [vmem:[#allocation4 + $0x28] sm:$0xff]
    %v418 = vld [vmem:[#allocation4 + $0x30] sm:$0xff]
    %v419 = vld [vmem:[#allocation4 + $0x38] sm:$0xff]
    %v420 = vld [vmem:[#allocation4 + $0x40] sm:$0xff]
    %v421 = vld [vmem:[#allocation4 + $0x48] sm:$0xff]
    %v422 = vld [vmem:[#allocation4 + $0x50] sm:$0xff]
    %v423 = vld [vmem:[#allocation4 + $0x58] sm:$0xff]
    %v424 = vld [vmem:[#allocation4 + $0x60] sm:$0xff]
    %v425 = vld [vmem:[#allocation4 + $0x68] sm:$0xff]
    %v426 = vld [vmem:[#allocation4 + $0x70] sm:$0xff]
    %v427 = vld [vmem:[#allocation4 + $0x78] sm:$0xff]
    %v428 = vld [vmem:[%s7] sm:$0x1]
    %v430 = vlaneseq
    %v431 = vshrl.u32 %v430, 7
    %v432 = vsub.s32 0, %v431
    %v433 = vrot.slane %v428, %v432
    %435 = vmatprep.subr.mxu0 0.0
    %436 = vmatpush1.msra.mxu0 %v412
    %437 = vmatprep.subr.mxu0 0.0
    %438 = vmatpush1.msra.mxu0 %v413
    %439 = vmatprep.subr.mxu0 0.0
    %440 = vmatpush1.msra.mxu0 %v414
    %441 = vmatprep.subr.mxu0 0.0
    %442 = vmatpush1.msra.mxu0 %v415
    %443 = vmatprep.subr.mxu0 0.0
    %444 = vmatpush1.msra.mxu0 %v416
    %445 = vmatprep.subr.mxu0 0.0
    %446 = vmatpush1.msra.mxu0 %v417
    %447 = vmatprep.subr.mxu0 0.0
    %448 = vmatpush1.msra.mxu0 %v418
    %449 = vmatprep.subr.mxu0 0.0
    %450 = vmatpush1.msra.mxu0 %v419
    %451 = vmatprep.subr.mxu0 0.0
    %452 = vmatpush1.msra.mxu0 %v420
    %453 = vmatprep.subr.mxu0 0.0
    %454 = vmatpush1.msra.mxu0 %v421
    %455 = vmatprep.subr.mxu0 0.0
    %456 = vmatpush1.msra.mxu0 %v422
    %457 = vmatprep.subr.mxu0 0.0
    %458 = vmatpush1.msra.mxu0 %v423
    %459 = vmatprep.subr.mxu0 0.0
    %460 = vmatpush1.msra.mxu0 %v424
    %461 = vmatprep.subr.mxu0 0.0
    %462 = vmatpush1.msra.mxu0 %v425
    %463 = vmatprep.subr.mxu0 0.0
    %464 = vmatpush1.msra.mxu0 %v426
    %465 = vmatprep.subr.mxu0 0.0
    %466 = vmatpush1.msra.mxu0 %v427
    %467 = vmatprep.subr.mxu0 0.0
    %468 = vmatpush1.msra.mxu0 0.0
    %469 = vmatprep.subr.mxu0 0.0
    %470 = vmatpush1.msra.mxu0 0.0
    %471 = vmatprep.subr.mxu0 0.0
    %472 = vmatpush1.msra.mxu0 0.0
    %473 = vmatprep.subr.mxu0 0.0
    %474 = vmatpush1.msra.mxu0 0.0
    %475 = vmatprep.subr.mxu0 0.0
    %476 = vmatpush1.msra.mxu0 0.0
    %477 = vmatprep.subr.mxu0 0.0
    %478 = vmatpush1.msra.mxu0 0.0
    %479 = vmatprep.subr.mxu0 0.0
    %480 = vmatpush1.msra.mxu0 0.0
    %481 = vmatprep.subr.mxu0 0.0
    %482 = vmatpush1.msra.mxu0 0.0
    %483 = vmatprep.subr.mxu0 0.0
    %484 = vmatpush1.msra.mxu0 0.0
    %485 = vmatprep.subr.mxu0 0.0
    %486 = vmatpush1.msra.mxu0 0.0
    %487 = vmatprep.subr.mxu0 0.0
    %488 = vmatpush1.msra.mxu0 0.0
    %489 = vmatprep.subr.mxu0 0.0
    %490 = vmatpush1.msra.mxu0 0.0
    %491 = vmatprep.subr.mxu0 0.0
    %492 = vmatpush1.msra.mxu0 0.0
    %493 = vmatprep.subr.mxu0 0.0
    %494 = vmatpush1.msra.mxu0 0.0
    %495 = vmatprep.subr.mxu0 0.0
    %496 = vmatpush1.msra.mxu0 0.0
    %497 = vmatprep.subr.mxu0 0.0
    %498 = vmatpush1.msra.mxu0 0.0
    %499 = vmatprep.mubr.f32.mxu0 0.0
    %500 = vmatmul.mubr.f32.gmra.mrb[0].mxu0 %v409
    %v501 = vpop.f32.mrb[0].mxu0
    %v502 = vadd.f32 %v433, %v501
    %v503 = vpop.f32.mrb[0].mxu0
    %504 = vdwg.mxu0
    %v505 = vld [vmem:[#allocation7] sm:$0xff]
    %v506 = vld [vmem:[#allocation7 + $0x8] sm:$0xff]
    %v507 = vld [vmem:[#allocation7 + $0x10] sm:$0xff]
    %v508 = vld [vmem:[#allocation7 + $0x18] sm:$0xff]
    %v509 = vld [vmem:[#allocation7 + $0x20] sm:$0xff]
    %v510 = vld [vmem:[#allocation7 + $0x28] sm:$0xff]
    %v511 = vld [vmem:[#allocation7 + $0x30] sm:$0xff]
    %v512 = vld [vmem:[#allocation7 + $0x38] sm:$0xff]
    %v513 = vld [vmem:[#allocation7 + $0x40] sm:$0xff]
    %v514 = vld [vmem:[#allocation7 + $0x48] sm:$0xff]
    %v515 = vld [vmem:[#allocation7 + $0x50] sm:$0xff]
    %v516 = vld [vmem:[#allocation7 + $0x58] sm:$0xff]
    %v517 = vld [vmem:[#allocation7 + $0x60] sm:$0xff]
    %v518 = vld [vmem:[#allocation7 + $0x68] sm:$0xff]
    %v519 = vld [vmem:[#allocation7 + $0x70] sm:$0xff]
    %v520 = vld [vmem:[#allocation7 + $0x78] sm:$0xff]
    %v521 = vld [vmem:[%s11] sm:$0x1]
    %v523 = vlaneseq
    %v524 = vshrl.u32 %v523, 7
    %v525 = vsub.s32 0, %v524
    %v526 = vrot.slane %v521, %v525
    %528 = vmatprep.subr.mxu0 0.0
    %529 = vmatpush1.msra.mxu0 %v505
    %530 = vmatprep.subr.mxu0 0.0
    %531 = vmatpush1.msra.mxu0 %v506
    %532 = vmatprep.subr.mxu0 0.0
    %533 = vmatpush1.msra.mxu0 %v507
    %534 = vmatprep.subr.mxu0 0.0
    %535 = vmatpush1.msra.mxu0 %v508
    %536 = vmatprep.subr.mxu0 0.0
    %537 = vmatpush1.msra.mxu0 %v509
    %538 = vmatprep.subr.mxu0 0.0
    %539 = vmatpush1.msra.mxu0 %v510
    %540 = vmatprep.subr.mxu0 0.0
    %541 = vmatpush1.msra.mxu0 %v511
    %542 = vmatprep.subr.mxu0 0.0
    %543 = vmatpush1.msra.mxu0 %v512
    %544 = vmatprep.subr.mxu0 0.0
    %545 = vmatpush1.msra.mxu0 %v513
    %546 = vmatprep.subr.mxu0 0.0
    %547 = vmatpush1.msra.mxu0 %v514
    %548 = vmatprep.subr.mxu0 0.0
    %549 = vmatpush1.msra.mxu0 %v515
    %550 = vmatprep.subr.mxu0 0.0
    %551 = vmatpush1.msra.mxu0 %v516
    %552 = vmatprep.subr.mxu0 0.0
    %553 = vmatpush1.msra.mxu0 %v517
    %554 = vmatprep.subr.mxu0 0.0
    %555 = vmatpush1.msra.mxu0 %v518
    %556 = vmatprep.subr.mxu0 0.0
    %557 = vmatpush1.msra.mxu0 %v519
    %558 = vmatprep.subr.mxu0 0.0
    %559 = vmatpush1.msra.mxu0 %v520
    %560 = vmatprep.subr.mxu0 0.0
    %561 = vmatpush1.msra.mxu0 0.0
    %562 = vmatprep.subr.mxu0 0.0
    %563 = vmatpush1.msra.mxu0 0.0
    %564 = vmatprep.subr.mxu0 0.0
    %565 = vmatpush1.msra.mxu0 0.0
    %566 = vmatprep.subr.mxu0 0.0
    %567 = vmatpush1.msra.mxu0 0.0
    %568 = vmatprep.subr.mxu0 0.0
    %569 = vmatpush1.msra.mxu0 0.0
    %570 = vmatprep.subr.mxu0 0.0
    %571 = vmatpush1.msra.mxu0 0.0
    %572 = vmatprep.subr.mxu0 0.0
    %573 = vmatpush1.msra.mxu0 0.0
    %574 = vmatprep.subr.mxu0 0.0
    %575 = vmatpush1.msra.mxu0 0.0
    %576 = vmatprep.subr.mxu0 0.0
    %577 = vmatpush1.msra.mxu0 0.0
    %578 = vmatprep.subr.mxu0 0.0
    %579 = vmatpush1.msra.mxu0 0.0
    %580 = vmatprep.subr.mxu0 0.0
    %581 = vmatpush1.msra.mxu0 0.0
    %582 = vmatprep.subr.mxu0 0.0
    %583 = vmatpush1.msra.mxu0 0.0
    %584 = vmatprep.subr.mxu0 0.0
    %585 = vmatpush1.msra.mxu0 0.0
    %586 = vmatprep.subr.mxu0 0.0
    %587 = vmatpush1.msra.mxu0 0.0
    %588 = vmatprep.subr.mxu0 0.0
    %589 = vmatpush1.msra.mxu0 0.0
    %590 = vmatprep.subr.mxu0 0.0
    %591 = vmatpush1.msra.mxu0 0.0
    %592 = vmatprep.mubr.f32.mxu0 0.0
    %593 = vmatmul.mubr.f32.gmra.mrb[0].mxu0 %v410
    %v594 = vpop.f32.mrb[0].mxu0
    %v595 = vadd.f32 %v526, %v594
    %v596 = vpop.f32.mrb[0].mxu0
    %597 = vdwg.mxu0
    %v598 = vld [vmem:[#allocation10] sm:$0xff]
    %v599 = vld [vmem:[#allocation10 + $0x8] sm:$0xff]
    %v600 = vld [vmem:[#allocation10 + $0x10] sm:$0xff]
    %v601 = vld [vmem:[#allocation10 + $0x18] sm:$0xff]
    %v602 = vld [vmem:[#allocation10 + $0x20] sm:$0xff]
    %v603 = vld [vmem:[#allocation10 + $0x28] sm:$0xff]
    %v604 = vld [vmem:[#allocation10 + $0x30] sm:$0xff]
    %v605 = vld [vmem:[#allocation10 + $0x38] sm:$0xff]
    %v606 = vld [vmem:[#allocation10 + $0x40] sm:$0xff]
    %v607 = vld [vmem:[#allocation10 + $0x48] sm:$0xff]
    %v608 = vld [vmem:[#allocation10 + $0x50] sm:$0xff]
    %v609 = vld [vmem:[#allocation10 + $0x58] sm:$0xff]
    %v610 = vld [vmem:[#allocation10 + $0x60] sm:$0xff]
    %v611 = vld [vmem:[#allocation10 + $0x68] sm:$0xff]
    %v612 = vld [vmem:[#allocation10 + $0x70] sm:$0xff]
    %v613 = vld [vmem:[#allocation10 + $0x78] sm:$0xff]
    %v614 = vld [vmem:[%s15] sm:$0x1]
    %v616 = vlaneseq
    %v617 = vshrl.u32 %v616, 7
    %v618 = vsub.s32 0, %v617
    %v619 = vrot.slane %v614, %v618
    %621 = vmatprep.subr.mxu0 0.0
    %622 = vmatpush1.msra.mxu0 %v598
    %623 = vmatprep.subr.mxu0 0.0
    %624 = vmatpush1.msra.mxu0 %v599
    %625 = vmatprep.subr.mxu0 0.0
    %626 = vmatpush1.msra.mxu0 %v600
    %627 = vmatprep.subr.mxu0 0.0
    %628 = vmatpush1.msra.mxu0 %v601
    %629 = vmatprep.subr.mxu0 0.0
    %630 = vmatpush1.msra.mxu0 %v602
    %631 = vmatprep.subr.mxu0 0.0
    %632 = vmatpush1.msra.mxu0 %v603
    %633 = vmatprep.subr.mxu0 0.0
    %634 = vmatpush1.msra.mxu0 %v604
    %635 = vmatprep.subr.mxu0 0.0
    %636 = vmatpush1.msra.mxu0 %v605
    %637 = vmatprep.subr.mxu0 0.0
    %638 = vmatpush1.msra.mxu0 %v606
    %639 = vmatprep.subr.mxu0 0.0
    %640 = vmatpush1.msra.mxu0 %v607
    %641 = vmatprep.subr.mxu0 0.0
    %642 = vmatpush1.msra.mxu0 %v608
    %643 = vmatprep.subr.mxu0 0.0
    %644 = vmatpush1.msra.mxu0 %v609
    %645 = vmatprep.subr.mxu0 0.0
    %646 = vmatpush1.msra.mxu0 %v610
    %647 = vmatprep.subr.mxu0 0.0
    %648 = vmatpush1.msra.mxu0 %v611
    %649 = vmatprep.subr.mxu0 0.0
    %650 = vmatpush1.msra.mxu0 %v612
    %651 = vmatprep.subr.mxu0 0.0
    %652 = vmatpush1.msra.mxu0 %v613
    %653 = vmatprep.subr.mxu0 0.0
    %654 = vmatpush1.msra.mxu0 0.0
    %655 = vmatprep.subr.mxu0 0.0
    %656 = vmatpush1.msra.mxu0 0.0
    %657 = vmatprep.subr.mxu0 0.0
    %658 = vmatpush1.msra.mxu0 0.0
    %659 = vmatprep.subr.mxu0 0.0
    %660 = vmatpush1.msra.mxu0 0.0
    %661 = vmatprep.subr.mxu0 0.0
    %662 = vmatpush1.msra.mxu0 0.0
    %663 = vmatprep.subr.mxu0 0.0
    %664 = vmatpush1.msra.mxu0 0.0
    %665 = vmatprep.subr.mxu0 0.0
    %666 = vmatpush1.msra.mxu0 0.0
    %667 = vmatprep.subr.mxu0 0.0
    %668 = vmatpush1.msra.mxu0 0.0
    %669 = vmatprep.subr.mxu0 0.0
    %670 = vmatpush1.msra.mxu0 0.0
    %671 = vmatprep.subr.mxu0 0.0
    %672 = vmatpush1.msra.mxu0 0.0
    %673 = vmatprep.subr.mxu0 0.0
    %674 = vmatpush1.msra.mxu0 0.0
    %675 = vmatprep.subr.mxu0 0.0
    %676 = vmatpush1.msra.mxu0 0.0
    %677 = vmatprep.subr.mxu0 0.0
    %678 = vmatpush1.msra.mxu0 0.0
    %679 = vmatprep.subr.mxu0 0.0
    %680 = vmatpush1.msra.mxu0 0.0
    %681 = vmatprep.subr.mxu0 0.0
    %682 = vmatpush1.msra.mxu0 0.0
    %683 = vmatprep.subr.mxu0 0.0
    %684 = vmatpush1.msra.mxu0 0.0
    %685 = vmatprep.mubr.f32.mxu0 0.0
    %686 = vmatmul.mubr.f32.gmra.mrb[0].mxu0 %v411
    %v687 = vpop.f32.mrb[0].mxu0
    %v688 = vadd.f32 %v619, %v687
    %v689 = vpop.f32.mrb[0].mxu0
    %690 = vdwg.mxu0
    %v691 = vld [vmem:[%s0] sm:$0xff]
    %v692 = vld [vmem:[%s4] sm:$0xff]
    %v693 = vld [vmem:[%s4 + $0x8] sm:$0xff]
    %v694 = vld [vmem:[%s4 + $0x10] sm:$0xff]
    %v695 = vld [vmem:[%s4 + $0x18] sm:$0xff]
    %v696 = vld [vmem:[%s4 + $0x20] sm:$0xff]
    %v697 = vld [vmem:[%s4 + $0x28] sm:$0xff]
    %v698 = vld [vmem:[%s4 + $0x30] sm:$0xff]
    %v699 = vld [vmem:[%s4 + $0x38] sm:$0xff]
    %v700 = vld [vmem:[%s4 + $0x40] sm:$0xff]
    %v701 = vld [vmem:[%s4 + $0x48] sm:$0xff]
    %v702 = vld [vmem:[%s4 + $0x50] sm:$0xff]
    %v703 = vld [vmem:[%s4 + $0x58] sm:$0xff]
    %v704 = vld [vmem:[%s4 + $0x60] sm:$0xff]
    %v705 = vld [vmem:[%s4 + $0x68] sm:$0xff]
    %v706 = vld [vmem:[%s4 + $0x70] sm:$0xff]
    %v707 = vld [vmem:[%s4 + $0x78] sm:$0xff]
    %v708 = vld [vmem:[%s5] sm:$0x1]
    %v710 = vlaneseq
    %v711 = vshrl.u32 %v710, 7
    %v712 = vsub.s32 0, %v711
    %v713 = vrot.slane %v708, %v712
    %715 = vmatprep.subr.mxu0 0.0
    %716 = vmatpush1.msra.mxu0 %v692
    %717 = vmatprep.subr.mxu0 0.0
    %718 = vmatpush1.msra.mxu0 %v693
    %719 = vmatprep.subr.mxu0 0.0
    %720 = vmatpush1.msra.mxu0 %v694
    %721 = vmatprep.subr.mxu0 0.0
    %722 = vmatpush1.msra.mxu0 %v695
    %723 = vmatprep.subr.mxu0 0.0
    %724 = vmatpush1.msra.mxu0 %v696
    %725 = vmatprep.subr.mxu0 0.0
    %726 = vmatpush1.msra.mxu0 %v697
    %727 = vmatprep.subr.mxu0 0.0
    %728 = vmatpush1.msra.mxu0 %v698
    %729 = vmatprep.subr.mxu0 0.0
    %730 = vmatpush1.msra.mxu0 %v699
    %731 = vmatprep.subr.mxu0 0.0
    %732 = vmatpush1.msra.mxu0 %v700
    %733 = vmatprep.subr.mxu0 0.0
    %734 = vmatpush1.msra.mxu0 %v701
    %735 = vmatprep.subr.mxu0 0.0
    %736 = vmatpush1.msra.mxu0 %v702
    %737 = vmatprep.subr.mxu0 0.0
    %738 = vmatpush1.msra.mxu0 %v703
    %739 = vmatprep.subr.mxu0 0.0
    %740 = vmatpush1.msra.mxu0 %v704
    %741 = vmatprep.subr.mxu0 0.0
    %742 = vmatpush1.msra.mxu0 %v705
    %743 = vmatprep.subr.mxu0 0.0
    %744 = vmatpush1.msra.mxu0 %v706
    %745 = vmatprep.subr.mxu0 0.0
    %746 = vmatpush1.msra.mxu0 %v707
    %747 = vmatprep.subr.mxu0 0.0
    %748 = vmatpush1.msra.mxu0 0.0
    %749 = vmatprep.subr.mxu0 0.0
    %750 = vmatpush1.msra.mxu0 0.0
    %751 = vmatprep.subr.mxu0 0.0
    %752 = vmatpush1.msra.mxu0 0.0
    %753 = vmatprep.subr.mxu0 0.0
    %754 = vmatpush1.msra.mxu0 0.0
    %755 = vmatprep.subr.mxu0 0.0
    %756 = vmatpush1.msra.mxu0 0.0
    %757 = vmatprep.subr.mxu0 0.0
    %758 = vmatpush1.msra.mxu0 0.0
    %759 = vmatprep.subr.mxu0 0.0
    %760 = vmatpush1.msra.mxu0 0.0
    %761 = vmatprep.subr.mxu0 0.0
    %762 = vmatpush1.msra.mxu0 0.0
    %763 = vmatprep.subr.mxu0 0.0
    %764 = vmatpush1.msra.mxu0 0.0
    %765 = vmatprep.subr.mxu0 0.0
    %766 = vmatpush1.msra.mxu0 0.0
    %767 = vmatprep.subr.mxu0 0.0
    %768 = vmatpush1.msra.mxu0 0.0
    %769 = vmatprep.subr.mxu0 0.0
    %770 = vmatpush1.msra.mxu0 0.0
    %771 = vmatprep.subr.mxu0 0.0
    %772 = vmatpush1.msra.mxu0 0.0
    %773 = vmatprep.subr.mxu0 0.0
    %774 = vmatpush1.msra.mxu0 0.0
    %775 = vmatprep.subr.mxu0 0.0
    %776 = vmatpush1.msra.mxu0 0.0
    %777 = vmatprep.subr.mxu0 0.0
    %778 = vmatpush1.msra.mxu0 0.0
    %779 = vmatprep.mubr.f32.mxu0 0.0
    %780 = vmatmul.mubr.f32.gmra.mrb[0].mxu0 %v691
    %v781 = vpop.f32.mrb[0].mxu0
    %v782 = vadd.f32 %v713, %v781
    %v783 = vpop.f32.mrb[0].mxu0
    %784 = vdwg.mxu0
    %v785 = vmul.f32 %v502, %v782
    %v786 = vmax.f32 %v785, 0.0
    %v787 = vld [vmem:[#allocation6] sm:$0xff]
    %v788 = vld [vmem:[#allocation6 + $0x8] sm:$0xff]
    %v789 = vld [vmem:[#allocation6 + $0x10] sm:$0xff]
    %v790 = vld [vmem:[#allocation6 + $0x18] sm:$0xff]
    %v791 = vld [vmem:[#allocation6 + $0x20] sm:$0xff]
    %v792 = vld [vmem:[#allocation6 + $0x28] sm:$0xff]
    %v793 = vld [vmem:[#allocation6 + $0x30] sm:$0xff]
    %v794 = vld [vmem:[#allocation6 + $0x38] sm:$0xff]
    %v795 = vld [vmem:[#allocation6 + $0x40] sm:$0xff]
    %v796 = vld [vmem:[#allocation6 + $0x48] sm:$0xff]
    %v797 = vld [vmem:[#allocation6 + $0x50] sm:$0xff]
    %v798 = vld [vmem:[#allocation6 + $0x58] sm:$0xff]
    %v799 = vld [vmem:[#allocation6 + $0x60] sm:$0xff]
    %v800 = vld [vmem:[#allocation6 + $0x68] sm:$0xff]
    %v801 = vld [vmem:[#allocation6 + $0x70] sm:$0xff]
    %v802 = vld [vmem:[#allocation6 + $0x78] sm:$0xff]
    %v803 = vld [vmem:[%s9] sm:$0x1]
    %v805 = vlaneseq
    %v806 = vshrl.u32 %v805, 7
    %v807 = vsub.s32 0, %v806
    %v808 = vrot.slane %v803, %v807
    %810 = vmatprep.subr.mxu0 0.0
    %811 = vmatpush1.msra.mxu0 %v787
    %812 = vmatprep.subr.mxu0 0.0
    %813 = vmatpush1.msra.mxu0 %v788
    %814 = vmatprep.subr.mxu0 0.0
    %815 = vmatpush1.msra.mxu0 %v789
    %816 = vmatprep.subr.mxu0 0.0
    %817 = vmatpush1.msra.mxu0 %v790
    %818 = vmatprep.subr.mxu0 0.0
    %819 = vmatpush1.msra.mxu0 %v791
    %820 = vmatprep.subr.mxu0 0.0
    %821 = vmatpush1.msra.mxu0 %v792
    %822 = vmatprep.subr.mxu0 0.0
    %823 = vmatpush1.msra.mxu0 %v793
    %824 = vmatprep.subr.mxu0 0.0
    %825 = vmatpush1.msra.mxu0 %v794
    %826 = vmatprep.subr.mxu0 0.0
    %827 = vmatpush1.msra.mxu0 %v795
    %828 = vmatprep.subr.mxu0 0.0
    %829 = vmatpush1.msra.mxu0 %v796
    %830 = vmatprep.subr.mxu0 0.0
    %831 = vmatpush1.msra.mxu0 %v797
    %832 = vmatprep.subr.mxu0 0.0
    %833 = vmatpush1.msra.mxu0 %v798
    %834 = vmatprep.subr.mxu0 0.0
    %835 = vmatpush1.msra.mxu0 %v799
    %836 = vmatprep.subr.mxu0 0.0
    %837 = vmatpush1.msra.mxu0 %v800
    %838 = vmatprep.subr.mxu0 0.0
    %839 = vmatpush1.msra.mxu0 %v801
    %840 = vmatprep.subr.mxu0 0.0
    %841 = vmatpush1.msra.mxu0 %v802
    %842 = vmatprep.subr.mxu0 0.0
    %843 = vmatpush1.msra.mxu0 0.0
    %844 = vmatprep.subr.mxu0 0.0
    %845 = vmatpush1.msra.mxu0 0.0
    %846 = vmatprep.subr.mxu0 0.0
    %847 = vmatpush1.msra.mxu0 0.0
    %848 = vmatprep.subr.mxu0 0.0
    %849 = vmatpush1.msra.mxu0 0.0
    %850 = vmatprep.subr.mxu0 0.0
    %851 = vmatpush1.msra.mxu0 0.0
    %852 = vmatprep.subr.mxu0 0.0
    %853 = vmatpush1.msra.mxu0 0.0
    %854 = vmatprep.subr.mxu0 0.0
    %855 = vmatpush1.msra.mxu0 0.0
    %856 = vmatprep.subr.mxu0 0.0
    %857 = vmatpush1.msra.mxu0 0.0
    %858 = vmatprep.subr.mxu0 0.0
    %859 = vmatpush1.msra.mxu0 0.0
    %860 = vmatprep.subr.mxu0 0.0
    %861 = vmatpush1.msra.mxu0 0.0
    %862 = vmatprep.subr.mxu0 0.0
    %863 = vmatpush1.msra.mxu0 0.0
    %864 = vmatprep.subr.mxu0 0.0
    %865 = vmatpush1.msra.mxu0 0.0
    %866 = vmatprep.subr.mxu0 0.0
    %867 = vmatpush1.msra.mxu0 0.0
    %868 = vmatprep.subr.mxu0 0.0
    %869 = vmatpush1.msra.mxu0 0.0
    %870 = vmatprep.subr.mxu0 0.0
    %871 = vmatpush1.msra.mxu0 0.0
    %872 = vmatprep.subr.mxu0 0.0
    %873 = vmatpush1.msra.mxu0 0.0
    %874 = vmatprep.mubr.f32.mxu0 0.0
    %875 = vmatmul.mubr.f32.gmra.mrb[0].mxu0 %v786
    %v876 = vpop.f32.mrb[0].mxu0
    %v877 = vadd.f32 %v808, %v876
    %v878 = vpop.f32.mrb[0].mxu0
    %879 = vdwg.mxu0
    %v880 = vmul.f32 %v595, %v877
    %v881 = vmax.f32 %v880, 0.0
    %v882 = vld [vmem:[#allocation9] sm:$0xff]
    %v883 = vld [vmem:[#allocation9 + $0x8] sm:$0xff]
    %v884 = vld [vmem:[#allocation9 + $0x10] sm:$0xff]
    %v885 = vld [vmem:[#allocation9 + $0x18] sm:$0xff]
    %v886 = vld [vmem:[#allocation9 + $0x20] sm:$0xff]
    %v887 = vld [vmem:[#allocation9 + $0x28] sm:$0xff]
    %v888 = vld [vmem:[#allocation9 + $0x30] sm:$0xff]
    %v889 = vld [vmem:[#allocation9 + $0x38] sm:$0xff]
    %v890 = vld [vmem:[#allocation9 + $0x40] sm:$0xff]
    %v891 = vld [vmem:[#allocation9 + $0x48] sm:$0xff]
    %v892 = vld [vmem:[#allocation9 + $0x50] sm:$0xff]
    %v893 = vld [vmem:[#allocation9 + $0x58] sm:$0xff]
    %v894 = vld [vmem:[#allocation9 + $0x60] sm:$0xff]
    %v895 = vld [vmem:[#allocation9 + $0x68] sm:$0xff]
    %v896 = vld [vmem:[#allocation9 + $0x70] sm:$0xff]
    %v897 = vld [vmem:[#allocation9 + $0x78] sm:$0xff]
    %v898 = vld [vmem:[%s13] sm:$0x1]
    %v900 = vlaneseq
    %v901 = vshrl.u32 %v900, 7
    %v902 = vsub.s32 0, %v901
    %v903 = vrot.slane %v898, %v902
    %905 = vmatprep.subr.mxu0 0.0
    %906 = vmatpush1.msra.mxu0 %v882
    %907 = vmatprep.subr.mxu0 0.0
    %908 = vmatpush1.msra.mxu0 %v883
    %909 = vmatprep.subr.mxu0 0.0
    %910 = vmatpush1.msra.mxu0 %v884
    %911 = vmatprep.subr.mxu0 0.0
    %912 = vmatpush1.msra.mxu0 %v885
    %913 = vmatprep.subr.mxu0 0.0
    %914 = vmatpush1.msra.mxu0 %v886
    %915 = vmatprep.subr.mxu0 0.0
    %916 = vmatpush1.msra.mxu0 %v887
    %917 = vmatprep.subr.mxu0 0.0
    %918 = vmatpush1.msra.mxu0 %v888
    %919 = vmatprep.subr.mxu0 0.0
    %920 = vmatpush1.msra.mxu0 %v889
    %921 = vmatprep.subr.mxu0 0.0
    %922 = vmatpush1.msra.mxu0 %v890
    %923 = vmatprep.subr.mxu0 0.0
    %924 = vmatpush1.msra.mxu0 %v891
    %925 = vmatprep.subr.mxu0 0.0
    %926 = vmatpush1.msra.mxu0 %v892
    %927 = vmatprep.subr.mxu0 0.0
    %928 = vmatpush1.msra.mxu0 %v893
    %929 = vmatprep.subr.mxu0 0.0
    %930 = vmatpush1.msra.mxu0 %v894
    %931 = vmatprep.subr.mxu0 0.0
    %932 = vmatpush1.msra.mxu0 %v895
    %933 = vmatprep.subr.mxu0 0.0
    %934 = vmatpush1.msra.mxu0 %v896
    %935 = vmatprep.subr.mxu0 0.0
    %936 = vmatpush1.msra.mxu0 %v897
    %937 = vmatprep.subr.mxu0 0.0
    %938 = vmatpush1.msra.mxu0 0.0
    %939 = vmatprep.subr.mxu0 0.0
    %940 = vmatpush1.msra.mxu0 0.0
    %941 = vmatprep.subr.mxu0 0.0
    %942 = vmatpush1.msra.mxu0 0.0
    %943 = vmatprep.subr.mxu0 0.0
    %944 = vmatpush1.msra.mxu0 0.0
    %945 = vmatprep.subr.mxu0 0.0
    %946 = vmatpush1.msra.mxu0 0.0
    %947 = vmatprep.subr.mxu0 0.0
    %948 = vmatpush1.msra.mxu0 0.0
    %949 = vmatprep.subr.mxu0 0.0
    %950 = vmatpush1.msra.mxu0 0.0
    %951 = vmatprep.subr.mxu0 0.0
    %952 = vmatpush1.msra.mxu0 0.0
    %953 = vmatprep.subr.mxu0 0.0
    %954 = vmatpush1.msra.mxu0 0.0
    %955 = vmatprep.subr.mxu0 0.0
    %956 = vmatpush1.msra.mxu0 0.0
    %957 = vmatprep.subr.mxu0 0.0
    %958 = vmatpush1.msra.mxu0 0.0
    %959 = vmatprep.subr.mxu0 0.0
    %960 = vmatpush1.msra.mxu0 0.0
    %961 = vmatprep.subr.mxu0 0.0
    %962 = vmatpush1.msra.mxu0 0.0
    %963 = vmatprep.subr.mxu0 0.0
    %964 = vmatpush1.msra.mxu0 0.0
    %965 = vmatprep.subr.mxu0 0.0
    %966 = vmatpush1.msra.mxu0 0.0
    %967 = vmatprep.subr.mxu0 0.0
    %968 = vmatpush1.msra.mxu0 0.0
    %969 = vmatprep.mubr.f32.mxu0 0.0
    %970 = vmatmul.mubr.f32.gmra.mrb[0].mxu0 %v881
    %v971 = vpop.f32.mrb[0].mxu0
    %v972 = vadd.f32 %v903, %v971
    %v973 = vpop.f32.mrb[0].mxu0
    %974 = vdwg.mxu0
    %v975 = vmul.f32 %v688, %v972
    %976 = vst [vmem:[%s16] sm:$0xff] %v975
    // Predicated region
    $region90: #{forward_impl.1} parent=1 // pred_check
      _
    $region91: #{forward_impl.1} parent=1 // pred_check_branch
      %978 = sbr.rel (0) target = $region93
    $region92: #{forward_impl.1} parent=1 // pred_region
      _
    $region93: #{forward_impl.1} parent=1 // pred_fallthru
      _
    // Predicated region
    $region94: #{forward_impl.1} parent=1 // pred_check
      _
    $region95: #{forward_impl.1} parent=1 // pred_check_branch
      %980 = sbr.rel (0) target = $region97
    $region96: #{forward_impl.1} parent=1 // pred_region
      _
    $region97: #{forward_impl.1} parent=1 // pred_fallthru
      _
    %981 = vsyncpa [#allocation3], 1
    %982 = vsyncpa [#allocation5], 1
    %983 = vsyncpa [#allocation8], 1
    %984 = vsyncpa [#allocation11], 1

</llo_original>
